<compile_context>
chip_gen: v6e
topology: v6e:2x2x1
jax: 0.10.0
libtpu: 0.0.40
codegen_flags: <defaults>
</compile_context>

<pallas_src>
from functools import partial

import jax
import jax.numpy as jnp
from jax.experimental import pallas as pl
from jax.experimental.pallas import tpu as pltpu

_LANE = 128   # vreg lane width
_SLAB = 256   # rows per in-kernel reduction slab (multiple of 8/16/32 packing)


def _neg_mean_partial_kernel(rows_ref, x_ref, o_ref):
    """Accumulate per-core partial sums of the valid rows of x into o_ref.

    rows_ref : SMEM scalar prefetch, [1] int32 -> number of valid rows
    x_ref    : VMEM tile (tile_rows, 128), native input dtype
    o_ref    : VMEM (1, 8, 128) f32, resident per-core partial-sum accumulator
    """
    c = pl.program_id(0)                 # core index ("parallel" axis)
    j = pl.program_id(1)                 # sequential step within this core
    steps = pl.num_programs(1)

    @pl.when(j == 0)
    def _init():
        o_ref[...] = jnp.zeros_like(o_ref)

    tile_rows = x_ref.shape[0]                              # static
    slab_rows = tile_rows if tile_rows < _SLAB else _SLAB   # static
    num_slabs = tile_rows // slab_rows                      # static & exact

    blk = c * steps + j                  # logical (unclamped) block index
    row0 = blk * tile_rows               # first logical row of this block
    n_rows = rows_ref[0]
    is_full = (row0 + tile_rows) <= n_rows   # every row of this block valid?

    def tile_sum(masked):
        # Slab-wise reduction: the f32 cast only ever materializes one small
        # slab; partials accumulate into a single (8, 128) f32 value.
        def body(i, acc):
            start = i * slab_rows
            if not isinstance(start, int):
                start = pl.multiple_of(start, slab_rows)
            slab = x_ref[pl.ds(start, slab_rows), :].astype(jnp.float32)
            if masked:
                rid = (jax.lax.broadcasted_iota(jnp.int32, (slab_rows, _LANE), 0)
                       + row0 + start)
                # select -> garbage/NaN rows contribute exactly 0.0
                slab = jnp.where(rid < n_rows, slab, jnp.float32(0.0))
            return acc + jnp.sum(slab.reshape(slab_rows // 8, 8, _LANE), axis=0)

        acc = jnp.zeros((8, _LANE), jnp.float32)
        if num_slabs <= 64:              # default configs: fully static unroll
            for i in range(num_slabs):
                acc = body(i, acc)
            return acc
        return jax.lax.fori_loop(0, num_slabs, body, acc, unroll=8)

    # Fast path: interior blocks skip iota / compare / select entirely.
    @pl.when(is_full)
    def _interior():
        o_ref[...] = o_ref[...] + tile_sum(False)[None, :, :]

    # Tail path: ragged last block and clamped redundant steps are masked by
    # logical row index.
    @pl.when(jnp.logical_not(is_full))
    def _tail():
        o_ref[...] = o_ref[...] + tile_sum(True)[None, :, :]


def _default_num_cores():
    # Megacore parts (2 TensorCores/chip): v4, v5p, v7x.  v5e/v6e have 1 TC.
    try:
        kind = jax.devices()[0].device_kind.lower()
    except Exception:
        return 1
    if "v7" in kind or "7x" in kind or "v4" in kind or "v5p" in kind:
        return 2
    return 1


@partial(jax.jit, static_argnames=("block_bytes", "num_cores"))
def _hinge_gan_g_loss_impl(x, *, block_bytes, num_cores):
    n = x.size
    flat = x.reshape(-1)                              # free row-major reshape
    itemsize = jnp.dtype(x.dtype).itemsize
    row_mult = {4: 8, 2: 16, 1: 32}.get(itemsize, 8)  # sublane packing rows

    rows = n // _LANE                                 # complete 128-lane rows
    aligned_n = rows * _LANE

    total = jnp.zeros((), jnp.float32)

    if rows >= row_mult:
        # Only a multiple-of-128 prefix can be viewed as (rows, 128); the
        # <128-element remainder is summed below.  When n % 128 == 0 (the
        # common case) this is a zero-copy reshape — no pad, no concat.
        x2d = (flat if aligned_n == n else flat[:aligned_n]).reshape(rows, _LANE)

        # Block rows: target ~block_bytes per DMA block, multiple of the
        # dtype packing (and of _SLAB once rows allow it).
        target_rows = max(row_mult, block_bytes // (_LANE * itemsize))
        if rows < _SLAB:
            tr = max(row_mult, (min(rows, target_rows) // row_mult) * row_mult)
        else:
            tr = max(_SLAB, (min(rows, target_rows) // _SLAB) * _SLAB)

        num_blocks = -(-rows // tr)
        nc = max(1, min(num_cores, num_blocks))
        steps = -(-num_blocks // nc)

        def x_index_map(c, j, rows_s):
            # Clamp so redundant trailing steps re-read a valid block; their
            # logical row range lies past `rows`, so the kernel masks them out.
            return (jnp.minimum(c * steps + j, num_blocks - 1), 0)

        rows_arr = jnp.array([rows], dtype=jnp.int32)

        partial_sums = pl.pallas_call(
            _neg_mean_partial_kernel,
            out_shape=jax.ShapeDtypeStruct((nc, 8, _LANE), jnp.float32),
            grid_spec=pltpu.PrefetchScalarGridSpec(
                num_scalar_prefetch=1,
                grid=(nc, steps),
                in_specs=[pl.BlockSpec((tr, _LANE), x_index_map)],
                out_specs=pl.BlockSpec((1, 8, _LANE),
                                       lambda c, j, rows_s: (c, 0, 0)),
            ),
            compiler_params=pltpu.CompilerParams(
                dimension_semantics=("parallel", "arbitrary"),
                vmem_limit_bytes=32 * 1024 * 1024),
            cost_estimate=pl.CostEstimate(
                flops=2 * aligned_n,
                transcendentals=0,
                bytes_accessed=aligned_n * itemsize + nc * 8 * _LANE * 4),
        )(rows_arr, x2d)

        total = total + jnp.sum(partial_sums)

    if aligned_n != n or rows < row_mult:
        # Sub-row tail (<128 elements) and/or tiny inputs: plain f32 sum.
        tail_start = aligned_n if rows >= row_mult else 0
        total = total + jnp.sum(flat[tail_start:].astype(jnp.float32))

    loss = -(total / n)
    if jnp.issubdtype(x.dtype, jnp.floating):
        loss = loss.astype(x.dtype)       # match PyTorch's output dtype
    return loss


def hinge_gan_g_loss(scores_fake, *, block_bytes=2 * 1024 * 1024, num_cores=None):
    """Pallas equivalent of HingeGANGLoss().forward(scores_fake)."""
    if num_cores is None:
        num_cores = _default_num_cores()
    return _hinge_gan_g_loss_impl(jnp.asarray(scores_fake),
                                  block_bytes=block_bytes, num_cores=num_cores)


if __name__ == "__main__":
    key = jax.random.PRNGKey(0)

    # Discriminator scores for fake samples, e.g. PatchGAN output (B, C, H, W)
    scores_fake = jax.random.normal(key, (2, 4, 16, 16), dtype=jnp.float32)
    loss = hinge_gan_g_loss(scores_fake)
    jax.block_until_ready(loss)
    ref = -jnp.mean(scores_fake.reshape(-1))
    assert jnp.allclose(loss, ref, atol=1e-5, rtol=1e-5), (loss, ref)

    # Ragged size (not a multiple of 128): exercises the wrapper tail path.
    x_odd = jax.random.normal(jax.random.PRNGKey(0), (3, 1, 7, 5),
                              dtype=jnp.float32)
    loss_odd = hinge_gan_g_loss(x_odd)
    jax.block_until_ready(loss_odd)
    ref_odd = -jnp.mean(x_odd.reshape(-1))
    assert jnp.allclose(loss_odd, ref_odd, atol=1e-5, rtol=1e-5), (loss_odd, ref_odd)

    # Multi-block + ragged last block + clamped redundant steps (small
    # block_bytes so several grid steps are exercised at a modest size).
    x_big = jax.random.normal(jax.random.PRNGKey(0), (5, 4, 125, 128),
                              dtype=jnp.float32)
    loss_big = hinge_gan_g_loss(x_big, block_bytes=256 * 1024)
    jax.block_until_ready(loss_big)
    ref_big = -jnp.mean(x_big.reshape(-1))
    assert jnp.allclose(loss_big, ref_big, atol=1e-5, rtol=1e-5), (loss_big, ref_big)

    # bf16 input through the kernel path: native-dtype DMA, f32 accumulation.
    x_bf16 = jax.random.normal(jax.random.PRNGKey(0), (4, 8, 32, 32),
                               dtype=jnp.bfloat16)
    loss_bf16 = hinge_gan_g_loss(x_bf16)
    jax.block_until_ready(loss_bf16)
    ref_bf16 = -jnp.mean(x_bf16.astype(jnp.float32).reshape(-1))
    assert jnp.allclose(loss_bf16.astype(jnp.float32), ref_bf16,
                        atol=1e-2, rtol=1e-2), (loss_bf16, ref_bf16)

    print("KERNEL_OK")
</pallas_src>

<mosaic_0001>
module attributes {stable_mosaic.version = 11 : i64} {
  func.func @_neg_mean_partial_kernel(%arg0: i32, %arg1: i32, %arg2: memref<1xi32, #tpu.memory_space<smem>>, %arg3: memref<16x128xf32, #tpu.memory_space<vmem>>, %arg4: memref<1x8x128xf32, #tpu.memory_space<vmem>>) attributes {dimension_semantics = [#tpu.dimension_semantics<parallel>, #tpu.dimension_semantics<arbitrary>], iteration_bounds = array<i64: 1, 1>, scalar_prefetch = 1 : i64, scratch_operands = 0 : i64, tpu.core_type = #tpu.core_type<tc>, window_params = [{transform_indices = @transform_0, window_bounds = array<i64: 16, 128>}, {transform_indices = @transform_1, window_bounds = array<i64: 1, 8, 128>}]} {
    %c0_i32 = arith.constant 0 : i32
    %0 = arith.cmpi eq, %arg1, %c0_i32 : i32
    %1 = arith.extui %0 : i1 to i32
    %c0_i32_0 = arith.constant 0 : i32
    %2 = arith.cmpi ne, %1, %c0_i32_0 : i32
    scf.if %2 {
      %cst = arith.constant 0.000000e+00 : f32
      %14 = vector.broadcast %cst : f32 to vector<1x8x128xf32>
      %c0_4 = arith.constant 0 : index
      %c0_5 = arith.constant 0 : index
      %c0_6 = arith.constant 0 : index
      %15 = vector.load %arg4[%c0_4, %c0_5, %c0_6] : memref<1x8x128xf32, #tpu.memory_space<vmem>>, vector<1x8x128xf32>
      tpu.vector_store %arg4[%c0_4, %c0_5, %c0_6], %14 {strides = array<i32>} : memref<1x8x128xf32, #tpu.memory_space<vmem>>, vector<1x8x128xf32>,
    } else {
    }
    %c1_i32 = arith.constant 1 : i32
    %3 = arith.muli %arg0, %c1_i32 : i32
    %4 = arith.addi %3, %arg1 : i32
    %c16_i32 = arith.constant 16 : i32
    %5 = arith.muli %4, %c16_i32 : i32
    %c0 = arith.constant 0 : index
    %6 = memref.load %arg2[%c0] : memref<1xi32, #tpu.memory_space<smem>>
    %c16_i32_1 = arith.constant 16 : i32
    %7 = arith.addi %5, %c16_i32_1 : i32
    %8 = arith.cmpi sle, %7, %6 : i32
    %9 = arith.extui %8 : i1 to i32
    %c0_i32_2 = arith.constant 0 : i32
    %10 = arith.cmpi ne, %9, %c0_i32_2 : i32
    scf.if %10 {
      %c0_4 = arith.constant 0 : index
      %c0_5 = arith.constant 0 : index
      %c0_6 = arith.constant 0 : index
      %14 = vector.load %arg4[%c0_4, %c0_5, %c0_6] : memref<1x8x128xf32, #tpu.memory_space<vmem>>, vector<1x8x128xf32>
      %cst = arith.constant 0.000000e+00 : f32
      %15 = vector.broadcast %cst : f32 to vector<8x128xf32>
      %c0_7 = arith.constant 0 : index
      %c0_8 = arith.constant 0 : index
      %16 = vector.load %arg3[%c0_7, %c0_8] : memref<16x128xf32, #tpu.memory_space<vmem>>, vector<16x128xf32>
      %17 = vector.shape_cast %16 : vector<16x128xf32> to vector<2x8x128xf32>
      %cst_9 = arith.constant dense<0.000000e+00> : vector<8x128xf32>
      %18 = vector.multi_reduction <add>, %17, %cst_9 [0] : vector<2x8x128xf32> to vector<8x128xf32>
      %19 = arith.addf %15, %18 : vector<8x128xf32>
      %20 = vector.shape_cast %19 : vector<8x128xf32> to vector<1x8x128xf32>
      %21 = arith.addf %14, %20 : vector<1x8x128xf32>
      %c0_10 = arith.constant 0 : index
      %c0_11 = arith.constant 0 : index
      %c0_12 = arith.constant 0 : index
      %22 = vector.load %arg4[%c0_10, %c0_11, %c0_12] : memref<1x8x128xf32, #tpu.memory_space<vmem>>, vector<1x8x128xf32>
      tpu.vector_store %arg4[%c0_10, %c0_11, %c0_12], %21 {strides = array<i32>} : memref<1x8x128xf32, #tpu.memory_space<vmem>>, vector<1x8x128xf32>,
    } else {
    }
    %true = arith.constant true
    %11 = arith.xori %8, %true : i1
    %12 = arith.extui %11 : i1 to i32
    %c0_i32_3 = arith.constant 0 : i32
    %13 = arith.cmpi ne, %12, %c0_i32_3 : i32
    scf.if %13 {
      %c0_4 = arith.constant 0 : index
      %c0_5 = arith.constant 0 : index
      %c0_6 = arith.constant 0 : index
      %14 = vector.load %arg4[%c0_4, %c0_5, %c0_6] : memref<1x8x128xf32, #tpu.memory_space<vmem>>, vector<1x8x128xf32>
      %cst = arith.constant 0.000000e+00 : f32
      %15 = vector.broadcast %cst : f32 to vector<8x128xf32>
      %c0_7 = arith.constant 0 : index
      %c0_8 = arith.constant 0 : index
      %16 = vector.load %arg3[%c0_7, %c0_8] : memref<16x128xf32, #tpu.memory_space<vmem>>, vector<16x128xf32>
      %17 = tpu.iota {dimensions = array<i32: 0>} : vector<16x128xi32>
      %18 = vector.broadcast %5 : i32 to vector<16x128xi32>
      %19 = arith.addi %17, %18 : vector<16x128xi32>
      %c0_i32_9 = arith.constant 0 : i32
      %20 = vector.broadcast %c0_i32_9 : i32 to vector<16x128xi32>
      %21 = arith.addi %19, %20 : vector<16x128xi32>
      %22 = vector.broadcast %6 : i32 to vector<16x128xi32>
      %23 = arith.cmpi slt, %21, %22 : vector<16x128xi32>
      %cst_10 = arith.constant 0.000000e+00 : f32
      %24 = vector.broadcast %cst_10 : f32 to vector<16x128xf32>
      %25 = arith.select %23, %16, %24 : vector<16x128xi1>, vector<16x128xf32>
      %26 = vector.shape_cast %25 : vector<16x128xf32> to vector<2x8x128xf32>
      %cst_11 = arith.constant dense<0.000000e+00> : vector<8x128xf32>
      %27 = vector.multi_reduction <add>, %26, %cst_11 [0] : vector<2x8x128xf32> to vector<8x128xf32>
      %28 = arith.addf %15, %27 : vector<8x128xf32>
      %29 = vector.shape_cast %28 : vector<8x128xf32> to vector<1x8x128xf32>
      %30 = arith.addf %14, %29 : vector<1x8x128xf32>
      %c0_12 = arith.constant 0 : index
      %c0_13 = arith.constant 0 : index
      %c0_14 = arith.constant 0 : index
      %31 = vector.load %arg4[%c0_12, %c0_13, %c0_14] : memref<1x8x128xf32, #tpu.memory_space<vmem>>, vector<1x8x128xf32>
      tpu.vector_store %arg4[%c0_12, %c0_13, %c0_14], %30 {strides = array<i32>} : memref<1x8x128xf32, #tpu.memory_space<vmem>>, vector<1x8x128xf32>,
    } else {
    }
    return
  }
  func.func @transform_0(%arg0: i32, %arg1: i32, %arg2: memref<1xi32, #tpu.memory_space<smem>>) -> (i32, i32) {
    %c1_i32 = arith.constant 1 : i32
    %0 = arith.muli %arg0, %c1_i32 : i32
    %1 = arith.addi %0, %arg1 : i32
    %c0_i32 = arith.constant 0 : i32
    %2 = arith.minsi %1, %c0_i32 : i32
    %c0_i32_0 = arith.constant 0 : i32
    %c0_i32_1 = arith.constant 0 : i32
    return %2, %c0_i32_0 : i32, i32
  }
  func.func @transform_1(%arg0: i32, %arg1: i32, %arg2: memref<1xi32, #tpu.memory_space<smem>>) -> (i32, i32, i32) {
    %c0_i32 = arith.constant 0 : i32
    %c0_i32_0 = arith.constant 0 : i32
    %c0_i32_1 = arith.constant 0 : i32
    return %arg0, %c0_i32, %c0_i32_0 : i32, i32, i32
  }
}

</mosaic_0001>

<llo_original>
// kernel: _hinge_gan_g_loss_impl.1
$region0: #{_hinge_gan_g_loss_impl.1}
  #allocation0 [shape = 'u32[]', space=smem, size = 0x4, offset = 0x4, fixed_abs, tag = 'smem constant byte address 0x4 - core index']
  #allocation1 [shape = 'u32[144,128]{1,0:T(1,128)}', space=vmem, size = 0x12000, scoped, tag = 'internal scratch']
  #allocation2 [shape = 's32[1]{0}', space=sflag, size = 0x4, scoped, tag = 'scoped memory for _hinge_gan_g_loss_impl.1']
  #allocation3 [shape = 's32[1]{0:T(128)S(6)}', space=smem, size = 0x200, scoped, tag = 'prefetched SMEM operand 0']
  %s0 = inlined_call_operand.<no memory space> [shape: s32[1], index: 0, kind: input, shape index: {}]
  %s1 = inlined_call_operand.vmem [shape: f32[16,128], index: 1, kind: input, shape index: {}]
  %s2 = inlined_call_operand.vmem [shape: f32[1,8,128], index: 2, kind: output, shape index: {}]
  %s3 = sld [smem:[#allocation0]]
  $region26: #{_hinge_gan_g_loss_impl.1} parent=0
    _
  %s5 = ssub.s32 1, %s3
  %s6 = scalar_select 0, %s5, %s3
  %7 = sst [smem:[#allocation3]] %s0
  // Predicated region
  $region2: #{_hinge_gan_g_loss_impl.1} parent=0 // pred_check
    _
  $region3: #{_hinge_gan_g_loss_impl.1} parent=0 // pred_check_branch
    %9 = sbr.rel (0) target = $region5
  $region4: #{_hinge_gan_g_loss_impl.1} parent=0 // pred_region
    %s10 = sadd.s32 0, 0
    %p11 = scmp.lt.s32.totalorder %s10, 0
    %s12 = scalar_select %p11, %s10, 0
    %s13 = smul.u32 2, %s12
    %p14 = scmp.lt.s32.totalorder %s13, 1
    %s15 = scalar_select %p14, %s13, 1
    %s16 = smul.addr %s15, 8
    %s17 = scalar_lea.vmem %s1, %s16
    %s18 = sadd.s32 0, 0
    %p19 = scmp.lt.s32.totalorder %s18, 0
    %s20 = scalar_select %p19, %s18, 0
    %s21 = smul.u32 2, %s20
  $region5: #{_hinge_gan_g_loss_impl.1} parent=0 // pred_fallthru
    _
  %s22 = sadd.s32 0, 0
  %p23 = scmp.lt.s32.totalorder %s22, 0
  %s24 = scalar_select %p23, %s22, 0
  %s25 = smul.u32 2, %s24
  %p26 = scmp.lt.s32.totalorder %s25, 1
  %s27 = scalar_select %p26, %s25, 1
  %s28 = smul.addr %s27, 8
  %s29 = scalar_lea.vmem %s1, %s28
  %s30 = sadd.s32 0, 0
  %p31 = scmp.lt.s32.totalorder %s30, 0
  %s32 = scalar_select %p31, %s30, 0
  %s33 = smul.u32 2, %s32
  %p34 = scmp.lt.s32.totalorder %s33, 1
  %s35 = scalar_select %p34, %s33, 1
  %s36 = smul.addr %s35, 8
  %s37 = scalar_lea.vmem %s1, %s36
  %s38 = sadd.s32 0, 0
  %p39 = scmp.lt.s32.totalorder %s38, 0
  %s40 = scalar_select %p39, %s38, 0
  %s41 = smul.u32 2, %s40
  %p42 = scmp.eq.s32.totalorder 0, 0
  // Predicated region
  $region6: #{_hinge_gan_g_loss_impl.1} parent=0 // pred_check
    %p43 = pneg %p42
  $region7: #{_hinge_gan_g_loss_impl.1} parent=0 // pred_check_branch
    %45 = sbr.rel (%p43) target = $region9
  $region8: #{_hinge_gan_g_loss_impl.1} parent=0 // pred_region
    %46 = vst [vmem:[%s2] sm:$0xff] 0.0
  $region9: #{_hinge_gan_g_loss_impl.1} parent=0 // pred_fallthru
    _
  %s47 = sadd.s32 0, 0
  %s48 = smul.u32 %s47, 16
  %s49 = sld [smem:[#allocation3]]
  %s50 = sadd.s32 %s48, 16
  %p51 = scmp.le.s32.totalorder %s50, %s49
  // Predicated region
  $region10: #{_hinge_gan_g_loss_impl.1} parent=0 // pred_check
    %p52 = pneg %p51
  $region11: #{_hinge_gan_g_loss_impl.1} parent=0 // pred_check_branch
    %54 = sbr.rel (%p52) target = $region13
  $region12: #{_hinge_gan_g_loss_impl.1} parent=0 // pred_region
    %v55 = vld [vmem:[%s2] sm:$0xff]
    %v56 = vld [vmem:[%s37] sm:$0xff]
    %v57 = vld [vmem:[%s37 + $0x8] sm:$0xff]
    %v58 = vadd.f32 %v56, %v57
    %v59 = vadd.f32 %v58, 0.0
    %v60 = vadd.f32 %v55, %v59
    %61 = vst [vmem:[%s2] sm:$0xff] %v60
  $region13: #{_hinge_gan_g_loss_impl.1} parent=0 // pred_fallthru
    _
  %p62 = scmp.gt.s32.totalorder %s50, %s49
  // Predicated region
  $region14: #{_hinge_gan_g_loss_impl.1} parent=0 // pred_check
    %p63 = pneg %p62
  $region15: #{_hinge_gan_g_loss_impl.1} parent=0 // pred_check_branch
    %65 = sbr.rel (%p63) target = $region17
  $region16: #{_hinge_gan_g_loss_impl.1} parent=0 // pred_region
    %v66 = vld [vmem:[%s2] sm:$0xff]
    %v67 = vld [vmem:[%s37] sm:$0xff]
    %v68 = vld [vmem:[%s37 + $0x8] sm:$0xff]
    %v69 = vlaneseq
    %v70 = vshrl.u32 %v69, 7
    %v71 = vadd.s32 %v70, 8
    %v72 = vstv %s48
    %v73 = vadd.s32 %v70, %v72
    %v74 = vadd.s32 %v71, %v72
    %v75 = vstv %s49
    %vm76 = vcmp.lt.s32.totalorder %v73, %v75
    %vm77 = vcmp.lt.s32.totalorder %v74, %v75
    %v78 = vsel %vm76, %v67, 0.0
    %v79 = vsel %vm77, %v68, 0.0
    %v80 = vadd.f32 %v78, %v79
    %v81 = vadd.f32 %v80, 0.0
    %v82 = vadd.f32 %v66, %v81
    %83 = vst [vmem:[%s2] sm:$0xff] %v82
  $region17: #{_hinge_gan_g_loss_impl.1} parent=0 // pred_fallthru
    _
  // Predicated region
  $region18: #{_hinge_gan_g_loss_impl.1} parent=0 // pred_check
    _
  $region19: #{_hinge_gan_g_loss_impl.1} parent=0 // pred_check_branch
    %85 = sbr.rel (0) target = $region21
  $region20: #{_hinge_gan_g_loss_impl.1} parent=0 // pred_region
    _
  $region21: #{_hinge_gan_g_loss_impl.1} parent=0 // pred_fallthru
    _
  // Predicated region
  $region22: #{_hinge_gan_g_loss_impl.1} parent=0 // pred_check
    _
  $region23: #{_hinge_gan_g_loss_impl.1} parent=0 // pred_check_branch
    %87 = sbr.rel (0) target = $region25
  $region24: #{_hinge_gan_g_loss_impl.1} parent=0 // pred_region
    _
  $region25: #{_hinge_gan_g_loss_impl.1} parent=0 // pred_fallthru
    _

</llo_original>
